<compile_context>
chip_gen: v5e
topology: v5e:2x2
jax: 0.10.0
libtpu: 0.0.40
codegen_flags: <defaults>
</compile_context>

<pallas_src>
import jax
import jax.numpy as jnp
from jax.experimental import pallas as pl
from jax.experimental.pallas import tpu as pltpu


def _multitask_kernel(x_ref, w_ref, b_ref, out_ref):
    # x_ref:   (tile_B, C, HW)    backbone feature map, NCHW with spatial flattened
    # w_ref:   (C, Npad)          concatenated head weights (transposed, 1/HW folded, zero-padded)
    # b_ref:   (1, Npad)          concatenated head biases (zero-padded)
    # out_ref: (1, tile_B, Npad)  concatenated head logits for this batch tile
    #
    # Global average pool == sum over the spatial (lane) axis; the 1/(H*W)
    # scale is pre-folded into the weights.  dtype=f32 keeps the upcast fused
    # inside the reduction (no materialized f32 copy of the streamed tile).
    feats = jnp.sum(x_ref[...], axis=-1, dtype=jnp.float32)              # (tile_B, C)
    out = jnp.dot(feats, w_ref[...], preferred_element_type=jnp.float32)  # (tile_B, Npad)
    out = out + b_ref[...]
    out_ref[...] = out[None, :, :].astype(out_ref.dtype)


def _vmem_limit_bytes():
    """Generation-aware VMEM limit: ~8 MiB headroom below physical capacity,
    capped at 100 MiB (v5e/v6e have 128 MiB, v7x has 64 MiB per TensorCore)."""
    cap = None
    try:
        cap = getattr(pltpu.get_tpu_info(), "vmem_capacity_bytes", None)
    except Exception:
        cap = None
    if not cap:
        cap = 64 << 20  # conservative fallback = v7x physical VMEM per TC
    return max(min(cap - (8 << 20), 100 << 20), 16 << 20)


def _padded_image_bytes(C, HW, dtype):
    # VMEM cost of ONE image inside the (tile_b, C, HW) block after Mosaic's
    # (sublane, lane) = (8, 128) layout padding of the last two dims.
    c_pad = pl.cdiv(C, 8) * 8
    hw_pad = pl.cdiv(HW, 128) * 128
    return c_pad * hw_pad * jnp.dtype(dtype).itemsize


def _pick_tile_b(B, per_image_bytes, x_budget_bytes, max_tile=64):
    """Largest divisor of B whose double-buffered x block fits the VMEM budget,
    preferring >= 2 grid steps so both v7x TensorCores get batch tiles."""
    cap = max(1, min(x_budget_bytes // (2 * per_image_bytes), max_tile))
    divisors = [d for d in range(1, B + 1) if B % d == 0]
    fitting = [d for d in divisors if d <= cap] or [1]
    multi_step = [d for d in fitting if B // d >= 2]
    return max(multi_step) if multi_step else max(fitting)


def multitask_forward(x_nchw, w_cat, b_cat, head_sizes):
    """x_nchw: (B, C, H, W) backbone feature map.  Stream it in whatever dtype
    the backbone emits (bf16 recommended: the kernel is HBM-bandwidth bound on
    x; do NOT add a wrapper-side astype — that costs an extra HBM pass).

    w_cat: (C, N) concatenated head weights (already transposed: columns = heads).
    b_cat: (N,)   concatenated head biases.
    Returns a tuple of per-head logits (f32), split along N.
    """
    B, C, H, W = x_nchw.shape
    HW = H * W
    N = w_cat.shape[1]

    # Free reshape (no HBM transpose): keep NCHW, flatten spatial onto the lane axis.
    x = x_nchw.reshape(B, C, HW)

    # Fold the 1/(H*W) pooling scale into the weights and zero-pad the
    # concatenated head dim up to a multiple of 128 for full-lane stores.
    n_pad = pl.cdiv(N, 128) * 128
    w = jnp.pad(w_cat.astype(jnp.float32) / float(HW), ((0, 0), (0, n_pad - N)))
    b = jnp.pad(b_cat.astype(jnp.float32), (0, n_pad - N)).reshape(1, n_pad)

    # Generation- and dtype-aware tiling: budget the double-buffered x block
    # against VMEM after reserving the resident weights/bias and a slack
    # allowance for the (tiny, double-buffered) output and compiler scratch.
    vmem_limit = _vmem_limit_bytes()
    per_image = _padded_image_bytes(C, HW, x.dtype)
    resident = (pl.cdiv(C, 8) * 8) * n_pad * 4 + n_pad * 4
    x_budget = max(vmem_limit - resident - (4 << 20), 2 * per_image)
    tile_b = _pick_tile_b(B, per_image, x_budget)
    num_tiles = B // tile_b

    out3 = pl.pallas_call(
        _multitask_kernel,
        out_shape=jax.ShapeDtypeStruct((num_tiles, tile_b, n_pad), jnp.float32),
        grid_spec=pltpu.PrefetchScalarGridSpec(
            num_scalar_prefetch=0,
            grid=(num_tiles,),
            in_specs=[
                # Streamed + auto double-buffered over batch tiles (last two block
                # dims equal the full array dims, so any tile_b is legal).
                pl.BlockSpec((tile_b, C, HW), lambda i: (i, 0, 0)),
                # Weights / bias: constant block index -> VMEM-resident across steps.
                pl.BlockSpec((C, n_pad), lambda i: (0, 0)),
                pl.BlockSpec((1, n_pad), lambda i: (0, 0)),
            ],
            # 3-D output: last two block dims equal the full array dims, so any
            # tile_b (even 1) is legal, and Npad (multiple of 128) gives
            # lane-dense unmasked stores.
            out_specs=pl.BlockSpec((1, tile_b, n_pad), lambda i: (i, 0, 0)),
        ),
        compiler_params=pltpu.CompilerParams(
            # Independent batch tiles -> shard across v7x's 2 TensorCores
            # (no-op on v5e/v6e which have a single TC).
            dimension_semantics=("parallel",),
            vmem_limit_bytes=vmem_limit,
        ),
    )(x, w, b)

    out = out3.reshape(B, n_pad)

    # Split concatenated logits back into the four task heads (plain-JAX glue).
    splits = []
    off = 0
    for n in head_sizes:
        splits.append(out[:, off:off + n])
        off += n
    return tuple(splits)


def _init_linear(key, in_features, out_features):
    # Deterministic stand-in for nn.Linear's default init: U(-1/sqrt(in), 1/sqrt(in)).
    kw, kb = jax.random.split(key)
    bound = 1.0 / jnp.sqrt(in_features)
    w = jax.random.uniform(kw, (out_features, in_features), jnp.float32, -bound, bound)
    b = jax.random.uniform(kb, (out_features,), jnp.float32, -bound, bound)
    return w, b


if __name__ == "__main__":
    key = jax.random.PRNGKey(0)

    # Small shapes consistent with the module's forward:
    # backbone feature map (B, num_ftrs, H, W); real ResNet50 => num_ftrs=2048, H=W=7.
    B = 2
    num_ftrs = 256
    H = W = 4
    num_leaf, num_shape, num_trunk, num_trunk2 = 5, 4, 3, 6
    head_sizes = (num_leaf, num_shape, num_trunk, num_trunk2)

    kx, k1, k2, k3, k4 = jax.random.split(key, 5)
    x = jax.random.normal(kx, (B, num_ftrs, H, W), jnp.float32)

    w_leaf, b_leaf = _init_linear(k1, num_ftrs, num_leaf)
    w_shape, b_shape = _init_linear(k2, num_ftrs, num_shape)
    w_trunk, b_trunk = _init_linear(k3, num_ftrs, num_trunk)
    w_trunk2, b_trunk2 = _init_linear(k4, num_ftrs, num_trunk2)

    # PyTorch Linear does x @ W.T + b, so stack W's and transpose once.
    w_cat = jnp.concatenate([w_leaf, w_shape, w_trunk, w_trunk2], axis=0).T  # (C, N_total)
    b_cat = jnp.concatenate([b_leaf, b_shape, b_trunk, b_trunk2], axis=0)    # (N_total,)

    # --- f32 run, tight check against plain-JAX reference (avgpool + 4 linears) ---
    outs = multitask_forward(x, w_cat, b_cat, head_sizes)
    jax.block_until_ready(outs)

    feats_ref = jnp.mean(x, axis=(2, 3))  # == flatten of AdaptiveAvgPool2d((1,1))
    refs = (
        feats_ref @ w_leaf.T + b_leaf,
        feats_ref @ w_shape.T + b_shape,
        feats_ref @ w_trunk.T + b_trunk,
        feats_ref @ w_trunk2.T + b_trunk2,
    )
    for o, r in zip(outs, refs):
        assert o.shape == r.shape
        assert jnp.max(jnp.abs(o - r)) < 1e-4

    # --- bf16 feature-map run (half the HBM traffic); compare against a reference
    #     fed the same bf16-quantized input so only f32 rounding order differs ---
    x_bf16 = x.astype(jnp.bfloat16)
    outs_bf = multitask_forward(x_bf16, w_cat, b_cat, head_sizes)
    jax.block_until_ready(outs_bf)

    feats_ref_bf = jnp.mean(x_bf16.astype(jnp.float32), axis=(2, 3))
    refs_bf = (
        feats_ref_bf @ w_leaf.T + b_leaf,
        feats_ref_bf @ w_shape.T + b_shape,
        feats_ref_bf @ w_trunk.T + b_trunk,
        feats_ref_bf @ w_trunk2.T + b_trunk2,
    )
    for o, r in zip(outs_bf, refs_bf):
        assert o.shape == r.shape
        assert jnp.max(jnp.abs(o - r)) < 1e-3

    print("KERNEL_OK")
</pallas_src>

<mosaic_0001>
module attributes {stable_mosaic.version = 11 : i64} {
  func.func @_multitask_kernel(%arg0: i32, %arg1: memref<1x256x16xf32, #tpu.memory_space<vmem>>, %arg2: memref<256x128xf32, #tpu.memory_space<vmem>>, %arg3: memref<1x128xf32, #tpu.memory_space<vmem>>, %arg4: memref<1x1x128xf32, #tpu.memory_space<vmem>>) attributes {dimension_semantics = [#tpu.dimension_semantics<parallel>], iteration_bounds = array<i64: 2>, scalar_prefetch = 0 : i64, scratch_operands = 0 : i64, tpu.core_type = #tpu.core_type<tc>, window_params = [{transform_indices = @transform_0, window_bounds = array<i64: 1, 256, 16>}, {pipeline_mode = #tpu.pipeline_mode<synchronous>, transform_indices = @transform_1, window_bounds = array<i64: 256, 128>}, {pipeline_mode = #tpu.pipeline_mode<synchronous>, transform_indices = @transform_2, window_bounds = array<i64: 1, 128>}, {transform_indices = @transform_3, window_bounds = array<i64: 1, 1, 128>}]} {
    %c0 = arith.constant 0 : index
    %c0_0 = arith.constant 0 : index
    %c0_1 = arith.constant 0 : index
    %0 = vector.load %arg1[%c0, %c0_0, %c0_1] : memref<1x256x16xf32, #tpu.memory_space<vmem>>, vector<1x256x16xf32>
    %cst = arith.constant dense<0.000000e+00> : vector<1x256xf32>
    %1 = vector.multi_reduction <add>, %0, %cst [2] : vector<1x256x16xf32> to vector<1x256xf32>
    %c0_2 = arith.constant 0 : index
    %c0_3 = arith.constant 0 : index
    %2 = vector.load %arg2[%c0_2, %c0_3] : memref<256x128xf32, #tpu.memory_space<vmem>>, vector<256x128xf32>
    %cst_4 = arith.constant dense<0.000000e+00> : vector<1x128xf32>
    %3 = tpu.matmul %1, %2, %cst_4 {dimension_numbers = #tpu.dot_dimension_numbers<[1], [0], [0], [1], [0, 0, 1, 1], [], []>} : vector<1x256xf32>, vector<256x128xf32>, vector<1x128xf32> -> vector<1x128xf32>
    %c0_5 = arith.constant 0 : index
    %c0_6 = arith.constant 0 : index
    %4 = vector.load %arg3[%c0_5, %c0_6] : memref<1x128xf32, #tpu.memory_space<vmem>>, vector<1x128xf32>
    %5 = arith.addf %3, %4 : vector<1x128xf32>
    %6 = vector.shape_cast %5 : vector<1x128xf32> to vector<1x1x128xf32>
    %c0_7 = arith.constant 0 : index
    %c0_8 = arith.constant 0 : index
    %c0_9 = arith.constant 0 : index
    %7 = vector.load %arg4[%c0_7, %c0_8, %c0_9] : memref<1x1x128xf32, #tpu.memory_space<vmem>>, vector<1x1x128xf32>
    tpu.vector_store %arg4[%c0_7, %c0_8, %c0_9], %6 {strides = array<i32>} : memref<1x1x128xf32, #tpu.memory_space<vmem>>, vector<1x1x128xf32>,
    return
  }
  func.func @transform_0(%arg0: i32) -> (i32, i32, i32) {
    %c0_i32 = arith.constant 0 : i32
    %c0_i32_0 = arith.constant 0 : i32
    %c0_i32_1 = arith.constant 0 : i32
    return %arg0, %c0_i32, %c0_i32_0 : i32, i32, i32
  }
  func.func @transform_1(%arg0: i32) -> (i32, i32) {
    %c0_i32 = arith.constant 0 : i32
    %c0_i32_0 = arith.constant 0 : i32
    %c0_i32_1 = arith.constant 0 : i32
    return %c0_i32, %c0_i32_0 : i32, i32
  }
  func.func @transform_2(%arg0: i32) -> (i32, i32) {
    %c0_i32 = arith.constant 0 : i32
    %c0_i32_0 = arith.constant 0 : i32
    %c0_i32_1 = arith.constant 0 : i32
    return %c0_i32, %c0_i32_0 : i32, i32
  }
  func.func @transform_3(%arg0: i32) -> (i32, i32, i32) {
    %c0_i32 = arith.constant 0 : i32
    %c0_i32_0 = arith.constant 0 : i32
    %c0_i32_1 = arith.constant 0 : i32
    return %arg0, %c0_i32, %c0_i32_0 : i32, i32, i32
  }
}

</mosaic_0001>

<llo_original>
// kernel: tpu_custom_call.1
$region0: #{tpu_custom_call.1}
  #allocation0 [shape = 'u32[]', space=smem, size = 0x4, offset = 0x4, fixed_abs, tag = 'smem constant byte address 0x4 - core index']
  #allocation1 [shape = 'u32[72,128]{1,0:T(1,128)}', space=vmem, size = 0x9000, scoped, tag = 'internal scratch']
  %s0 = inlined_call_operand.vmem [shape: f32[2,256,16], index: 0, kind: input, shape index: {}]
  %s1 = inlined_call_operand.vmem [shape: f32[256,128], index: 1, kind: input, shape index: {}]
  %s2 = inlined_call_operand.vmem [shape: f32[1,128], index: 2, kind: input, shape index: {}]
  %s3 = inlined_call_operand.hbm [shape: f32[2,1,128], index: 3, kind: output, shape index: {}]
  %s4 = sld [smem:[#allocation0]]
  $region45: #{tpu_custom_call.1} parent=0
    _
  %s6 = ssub.s32 1, %s4
  %s7 = scalar_select 0, %s6, %s4
  $region1: #{tpu_custom_call.1} parent=0
    #allocation2 [shape = 'u8[1024]{0}', space=vmem, size = 0x400, scoped, tag = 'output window, operand 0']
    #allocation3 [shape = 's32[2]{0}', space=sflag, size = 0x8, scoped, tag = 'scoped memory for tpu_custom_call.1']
    %8 = vsyncpa [#allocation3], 0
    %s9 = scalar_lea.sflag [#allocation3], 1
    %10 = vsyncpa %s9, 0
    loop: start=0, step=1, limit=4
    $region2: #{tpu_custom_call.1} parent=1 // loop_pre_header
      _
    $region3: #{tpu_custom_call.1} parent=1 // loop_header
      %s12 = sphi 0, %s16
      %p13 = scmp.ge.s32.totalorder %s12, 4
      %s22 = sphi 0, %s24
      %s25 = sphi 0, %s22
      %s26 = sphi 0, %s25
      %s42 = sphi 0, %s26
      %s46 = sphi 0, %s46
      %s48 = sphi 0, %s46
      %s49 = sphi 0, %s48
      %s63 = sphi 0, %s49
      %s67 = sphi 0, %s67
      %s69 = sphi 0, %s67
      %s70 = sphi 0, %s69
      %s84 = sphi 0, %s70
      %s90 = sphi 0, %s92
      %s93 = sphi 0, %s90
      %s94 = sphi 0, %s93
      %s110 = sphi 0, %s94
    $region4: #{tpu_custom_call.1} parent=1 // loop_header_branch
      %15 = sbr.rel (%p13) target = $region8
    $region5: #{tpu_custom_call.1} parent=1 // loop_body
      %s17 = ssub.s32 %s12, 1
      %s18 = ssub.s32 %s12, 2
      %s19 = sadd.s32 %s12, 1
      %s20 = ssub.s32 %s12, %s19
      %p21 = scmp.eq.s32.totalorder %s20, 0
      %s23 = sadd.s32 %s22, 1
      %s24 = scalar_select %p21, %s22, %s23
      %p27 = pneg %p21
      %p28 = scmp.eq.s32.totalorder %s12, 1
      %p29 = por %p27, %p28
      %p30 = scmp.ne.s32.totalorder %s22, %s25
      %p31 = scmp.eq.s32.totalorder %s12, 0
      %p32 = por %p30, %p31
      %p33 = scmp.ne.s32.totalorder %s22, %s25
      %p34 = scmp.eq.s32.totalorder %s17, 1
      %p35 = por %p33, %p34
      %p36 = scmp.ne.s32.totalorder %s25, %s26
      %p37 = scmp.eq.s32.totalorder %s17, 0
      %p38 = por %p36, %p37
      %p39 = scmp.ne.s32.totalorder %s25, %s26
      %p40 = scmp.eq.s32.totalorder %s18, 1
      %p41 = por %p39, %p40
      %p43 = scmp.ne.s32.totalorder %s26, %s42
      %p44 = scmp.eq.s32.totalorder %s18, 0
      %p45 = por %p43, %p44
      %s47 = sadd.s32 %s46, 1
      %p50 = scmp.eq.s32.totalorder %s12, 1
      %p51 = scmp.ne.s32.totalorder %s46, %s48
      %p52 = scmp.eq.s32.totalorder %s12, 0
      %p53 = por %p51, %p52
      %p54 = scmp.ne.s32.totalorder %s46, %s48
      %p55 = scmp.eq.s32.totalorder %s17, 1
      %p56 = por %p54, %p55
      %p57 = scmp.ne.s32.totalorder %s48, %s49
      %p58 = scmp.eq.s32.totalorder %s17, 0
      %p59 = por %p57, %p58
      %p60 = scmp.ne.s32.totalorder %s48, %s49
      %p61 = scmp.eq.s32.totalorder %s18, 1
      %p62 = por %p60, %p61
      %p64 = scmp.ne.s32.totalorder %s49, %s63
      %p65 = scmp.eq.s32.totalorder %s18, 0
      %p66 = por %p64, %p65
      %s68 = sadd.s32 %s67, 1
      %p71 = scmp.eq.s32.totalorder %s12, 1
      %p72 = scmp.ne.s32.totalorder %s67, %s69
      %p73 = scmp.eq.s32.totalorder %s12, 0
      %p74 = por %p72, %p73
      %p75 = scmp.ne.s32.totalorder %s67, %s69
      %p76 = scmp.eq.s32.totalorder %s17, 1
      %p77 = por %p75, %p76
      %p78 = scmp.ne.s32.totalorder %s69, %s70
      %p79 = scmp.eq.s32.totalorder %s17, 0
      %p80 = por %p78, %p79
      %p81 = scmp.ne.s32.totalorder %s69, %s70
      %p82 = scmp.eq.s32.totalorder %s18, 1
      %p83 = por %p81, %p82
      %p85 = scmp.ne.s32.totalorder %s70, %s84
      %p86 = scmp.eq.s32.totalorder %s18, 0
      %p87 = por %p85, %p86
      %s88 = ssub.s32 %s12, %s19
      %p89 = scmp.eq.s32.totalorder %s88, 0
      %s91 = sadd.s32 %s90, 1
      %s92 = scalar_select %p89, %s90, %s91
      %p95 = pneg %p89
      %p96 = scmp.eq.s32.totalorder %s12, 1
      %p97 = por %p95, %p96
      %p98 = scmp.ne.s32.totalorder %s90, %s93
      %p99 = scmp.eq.s32.totalorder %s12, 0
      %p100 = por %p98, %p99
      %p101 = scmp.ne.s32.totalorder %s90, %s93
      %p102 = scmp.eq.s32.totalorder %s17, 1
      %p103 = por %p101, %p102
      %p104 = scmp.ne.s32.totalorder %s93, %s94
      %p105 = scmp.eq.s32.totalorder %s17, 0
      %p106 = por %p104, %p105
      %p107 = scmp.ne.s32.totalorder %s93, %s94
      %p108 = scmp.eq.s32.totalorder %s18, 1
      %p109 = por %p107, %p108
      %p111 = scmp.ne.s32.totalorder %s94, %s110
      %p112 = scmp.eq.s32.totalorder %s18, 0
      %p113 = por %p111, %p112
      %p114 = scmp.le.s32.totalorder 1, %s12
      %p115 = scmp.lt.s32.totalorder %s12, 3
      %p116 = pnand %p114, %p115
      %p117 = pneg %p116
      // Predicated region
      $region9: #{tpu_custom_call.1} parent=5 // pred_check
        _
      $region10: #{tpu_custom_call.1} parent=5 // pred_check_branch
        %119 = sbr.rel (%p116) target = $region12
      $region11: #{tpu_custom_call.1} parent=5 // pred_region
        %s120 = ssub.s32 %s12, 1
        // Predicated region
        $region13: #{tpu_custom_call.1} parent=11 // pred_check
          %p121 = pneg %p59
        $region14: #{tpu_custom_call.1} parent=11 // pred_check_branch
          %123 = sbr.rel (%p121) target = $region16
        $region15: #{tpu_custom_call.1} parent=11 // pred_region
          _
        $region16: #{tpu_custom_call.1} parent=11 // pred_fallthru
          _
        // Predicated region
        $region17: #{tpu_custom_call.1} parent=11 // pred_check
          %p124 = pneg %p80
        $region18: #{tpu_custom_call.1} parent=11 // pred_check_branch
          %126 = sbr.rel (%p124) target = $region20
        $region19: #{tpu_custom_call.1} parent=11 // pred_region
          _
        $region20: #{tpu_custom_call.1} parent=11 // pred_fallthru
          _
      $region12: #{tpu_custom_call.1} parent=5 // pred_fallthru
        _
      %p127 = scmp.lt.s32.totalorder %s12, 2
      // Predicated region
      $region21: #{tpu_custom_call.1} parent=5 // pred_check
        %p128 = pneg %p127
      $region22: #{tpu_custom_call.1} parent=5 // pred_check_branch
        %130 = sbr.rel (%p128) target = $region24
      $region23: #{tpu_custom_call.1} parent=5 // pred_region
        // Predicated region
        $region25: #{tpu_custom_call.1} parent=23 // pred_check
          %p131 = pneg %p32
        $region26: #{tpu_custom_call.1} parent=23 // pred_check_branch
          %133 = sbr.rel (%p131) target = $region28
        $region27: #{tpu_custom_call.1} parent=23 // pred_region
          %p134 = scmp.lt.s32.totalorder %s12, 1
          %s135 = scalar_select %p134, %s12, 1
          %s136 = smul.addr %s135, 32
          %s137 = smul.addr %s136, 8
          %s138 = scalar_lea.vmem %s0, %s137
        $region28: #{tpu_custom_call.1} parent=23 // pred_fallthru
          _
      $region24: #{tpu_custom_call.1} parent=5 // pred_fallthru
        _
      %p139 = scmp.le.s32.totalorder 1, %s12
      %p140 = scmp.lt.s32.totalorder %s12, 3
      %p141 = pnand %p139, %p140
      %p142 = pneg %p141
      // Predicated region
      $region29: #{tpu_custom_call.1} parent=5 // pred_check
        _
      $region30: #{tpu_custom_call.1} parent=5 // pred_check_branch
        %144 = sbr.rel (%p141) target = $region32
      $region31: #{tpu_custom_call.1} parent=5 // pred_region
        %s145 = ssub.s32 %s12, 1
        %p146 = scmp.lt.s32.totalorder %s17, 1
        %s147 = scalar_select %p146, %s17, 1
        %s148 = smul.addr %s147, 32
        %s149 = smul.addr %s148, 8
        %s150 = scalar_lea.vmem %s0, %s149
        %p151 = pneg %p38
        %p152 = pneg %p35
        %p153 = pneg %p59
        %p154 = pneg %p56
        %p155 = pneg %p80
        %p156 = pneg %p77
        %p157 = pneg %p106
        %p158 = pneg %p103
        %s159 = sand.u32 %s93, 1
        %s160 = scalar_lea.sflag [#allocation3], %s159
        %s161 = sand.u32 %s93, 1
        %s162 = scalar_lea.vmem [#allocation2], %s161
        %p163 = scmp.lt.s32.totalorder %s17, 1
        %s164 = scalar_select %p163, %s17, 1
        %s165 = smul.addr %s164, 32
        %s166 = smul.addr %s165, 8
        %s167 = scalar_lea.vmem %s0, %s166
        %v168 = vld [vmem:[%s167] sm:$0xff]
        %v169 = vld [vmem:[%s167 + $0x8] sm:$0xff]
        %v170 = vld [vmem:[%s167 + $0x10] sm:$0xff]
        %v171 = vld [vmem:[%s167 + $0x18] sm:$0xff]
        %v172 = vld [vmem:[%s167 + $0x20] sm:$0xff]
        %v173 = vld [vmem:[%s167 + $0x28] sm:$0xff]
        %v174 = vld [vmem:[%s167 + $0x30] sm:$0xff]
        %v175 = vld [vmem:[%s167 + $0x38] sm:$0xff]
        %v176 = vld [vmem:[%s167 + $0x40] sm:$0xff]
        %v177 = vld [vmem:[%s167 + $0x48] sm:$0xff]
        %v178 = vld [vmem:[%s167 + $0x50] sm:$0xff]
        %v179 = vld [vmem:[%s167 + $0x58] sm:$0xff]
        %v180 = vld [vmem:[%s167 + $0x60] sm:$0xff]
        %v181 = vld [vmem:[%s167 + $0x68] sm:$0xff]
        %v182 = vld [vmem:[%s167 + $0x70] sm:$0xff]
        %v183 = vld [vmem:[%s167 + $0x78] sm:$0xff]
        %v184 = vld [vmem:[%s167 + $0x80] sm:$0xff]
        %v185 = vld [vmem:[%s167 + $0x88] sm:$0xff]
        %v186 = vld [vmem:[%s167 + $0x90] sm:$0xff]
        %v187 = vld [vmem:[%s167 + $0x98] sm:$0xff]
        %v188 = vld [vmem:[%s167 + $0xa0] sm:$0xff]
        %v189 = vld [vmem:[%s167 + $0xa8] sm:$0xff]
        %v190 = vld [vmem:[%s167 + $0xb0] sm:$0xff]
        %v191 = vld [vmem:[%s167 + $0xb8] sm:$0xff]
        %v192 = vld [vmem:[%s167 + $0xc0] sm:$0xff]
        %v193 = vld [vmem:[%s167 + $0xc8] sm:$0xff]
        %v194 = vld [vmem:[%s167 + $0xd0] sm:$0xff]
        %v195 = vld [vmem:[%s167 + $0xd8] sm:$0xff]
        %v196 = vld [vmem:[%s167 + $0xe0] sm:$0xff]
        %v197 = vld [vmem:[%s167 + $0xe8] sm:$0xff]
        %v198 = vld [vmem:[%s167 + $0xf0] sm:$0xff]
        %v199 = vld [vmem:[%s167 + $0xf8] sm:$0xff]
        %vm200 = vcmask 130048
        %v201 = vsel %vm200, %v168, 0.0
        %202 = vadd.xlane.f32.xlu0 %v201
        %v203 = vpop.xlane.xlu0 %202
        %v204 = vsel %vm200, %v169, 0.0
        %205 = vadd.xlane.f32.xlu0 %v204
        %v206 = vpop.xlane.xlu0 %205
        %v207 = vsel %vm200, %v170, 0.0
        %208 = vadd.xlane.f32.xlu0 %v207
        %v209 = vpop.xlane.xlu0 %208
        %v210 = vsel %vm200, %v171, 0.0
        %211 = vadd.xlane.f32.xlu0 %v210
        %v212 = vpop.xlane.xlu0 %211
        %v213 = vsel %vm200, %v172, 0.0
        %214 = vadd.xlane.f32.xlu0 %v213
        %v215 = vpop.xlane.xlu0 %214
        %v216 = vsel %vm200, %v173, 0.0
        %217 = vadd.xlane.f32.xlu0 %v216
        %v218 = vpop.xlane.xlu0 %217
        %v219 = vsel %vm200, %v174, 0.0
        %220 = vadd.xlane.f32.xlu0 %v219
        %v221 = vpop.xlane.xlu0 %220
        %v222 = vsel %vm200, %v175, 0.0
        %223 = vadd.xlane.f32.xlu0 %v222
        %v224 = vpop.xlane.xlu0 %223
        %v225 = vsel %vm200, %v176, 0.0
        %226 = vadd.xlane.f32.xlu0 %v225
        %v227 = vpop.xlane.xlu0 %226
        %v228 = vsel %vm200, %v177, 0.0
        %229 = vadd.xlane.f32.xlu0 %v228
        %v230 = vpop.xlane.xlu0 %229
        %v231 = vsel %vm200, %v178, 0.0
        %232 = vadd.xlane.f32.xlu0 %v231
        %v233 = vpop.xlane.xlu0 %232
        %v234 = vsel %vm200, %v179, 0.0
        %235 = vadd.xlane.f32.xlu0 %v234
        %v236 = vpop.xlane.xlu0 %235
        %v237 = vsel %vm200, %v180, 0.0
        %238 = vadd.xlane.f32.xlu0 %v237
        %v239 = vpop.xlane.xlu0 %238
        %v240 = vsel %vm200, %v181, 0.0
        %241 = vadd.xlane.f32.xlu0 %v240
        %v242 = vpop.xlane.xlu0 %241
        %v243 = vsel %vm200, %v182, 0.0
        %244 = vadd.xlane.f32.xlu0 %v243
        %v245 = vpop.xlane.xlu0 %244
        %v246 = vsel %vm200, %v183, 0.0
        %247 = vadd.xlane.f32.xlu0 %v246
        %v248 = vpop.xlane.xlu0 %247
        %v249 = vsel %vm200, %v184, 0.0
        %250 = vadd.xlane.f32.xlu0 %v249
        %v251 = vpop.xlane.xlu0 %250
        %v252 = vsel %vm200, %v185, 0.0
        %253 = vadd.xlane.f32.xlu0 %v252
        %v254 = vpop.xlane.xlu0 %253
        %v255 = vsel %vm200, %v186, 0.0
        %256 = vadd.xlane.f32.xlu0 %v255
        %v257 = vpop.xlane.xlu0 %256
        %v258 = vsel %vm200, %v187, 0.0
        %259 = vadd.xlane.f32.xlu0 %v258
        %v260 = vpop.xlane.xlu0 %259
        %v261 = vsel %vm200, %v188, 0.0
        %262 = vadd.xlane.f32.xlu0 %v261
        %v263 = vpop.xlane.xlu0 %262
        %v264 = vsel %vm200, %v189, 0.0
        %265 = vadd.xlane.f32.xlu0 %v264
        %v266 = vpop.xlane.xlu0 %265
        %v267 = vsel %vm200, %v190, 0.0
        %268 = vadd.xlane.f32.xlu0 %v267
        %v269 = vpop.xlane.xlu0 %268
        %v270 = vsel %vm200, %v191, 0.0
        %271 = vadd.xlane.f32.xlu0 %v270
        %v272 = vpop.xlane.xlu0 %271
        %v273 = vsel %vm200, %v192, 0.0
        %274 = vadd.xlane.f32.xlu0 %v273
        %v275 = vpop.xlane.xlu0 %274
        %v276 = vsel %vm200, %v193, 0.0
        %277 = vadd.xlane.f32.xlu0 %v276
        %v278 = vpop.xlane.xlu0 %277
        %v279 = vsel %vm200, %v194, 0.0
        %280 = vadd.xlane.f32.xlu0 %v279
        %v281 = vpop.xlane.xlu0 %280
        %v282 = vsel %vm200, %v195, 0.0
        %283 = vadd.xlane.f32.xlu0 %v282
        %v284 = vpop.xlane.xlu0 %283
        %v285 = vsel %vm200, %v196, 0.0
        %286 = vadd.xlane.f32.xlu0 %v285
        %v287 = vpop.xlane.xlu0 %286
        %v288 = vsel %vm200, %v197, 0.0
        %289 = vadd.xlane.f32.xlu0 %v288
        %v290 = vpop.xlane.xlu0 %289
        %v291 = vsel %vm200, %v198, 0.0
        %292 = vadd.xlane.f32.xlu0 %v291
        %v293 = vpop.xlane.xlu0 %292
        %v294 = vsel %vm200, %v199, 0.0
        %295 = vadd.xlane.f32.xlu0 %v294
        %v296 = vpop.xlane.xlu0 %295
        %v297 = vld [vmem:[%s1] sm:$0xff]
        %v298 = vld [vmem:[%s1 + $0x8] sm:$0xff]
        %v299 = vld [vmem:[%s1 + $0x10] sm:$0xff]
        %v300 = vld [vmem:[%s1 + $0x18] sm:$0xff]
        %v301 = vld [vmem:[%s1 + $0x20] sm:$0xff]
        %v302 = vld [vmem:[%s1 + $0x28] sm:$0xff]
        %v303 = vld [vmem:[%s1 + $0x30] sm:$0xff]
        %v304 = vld [vmem:[%s1 + $0x38] sm:$0xff]
        %v305 = vld [vmem:[%s1 + $0x40] sm:$0xff]
        %v306 = vld [vmem:[%s1 + $0x48] sm:$0xff]
        %v307 = vld [vmem:[%s1 + $0x50] sm:$0xff]
        %v308 = vld [vmem:[%s1 + $0x58] sm:$0xff]
        %v309 = vld [vmem:[%s1 + $0x60] sm:$0xff]
        %v310 = vld [vmem:[%s1 + $0x68] sm:$0xff]
        %v311 = vld [vmem:[%s1 + $0x70] sm:$0xff]
        %v312 = vld [vmem:[%s1 + $0x78] sm:$0xff]
        %v313 = vld [vmem:[%s1 + $0x80] sm:$0xff]
        %v314 = vld [vmem:[%s1 + $0x88] sm:$0xff]
        %v315 = vld [vmem:[%s1 + $0x90] sm:$0xff]
        %v316 = vld [vmem:[%s1 + $0x98] sm:$0xff]
        %v317 = vld [vmem:[%s1 + $0xa0] sm:$0xff]
        %v318 = vld [vmem:[%s1 + $0xa8] sm:$0xff]
        %v319 = vld [vmem:[%s1 + $0xb0] sm:$0xff]
        %v320 = vld [vmem:[%s1 + $0xb8] sm:$0xff]
        %v321 = vld [vmem:[%s1 + $0xc0] sm:$0xff]
        %v322 = vld [vmem:[%s1 + $0xc8] sm:$0xff]
        %v323 = vld [vmem:[%s1 + $0xd0] sm:$0xff]
        %v324 = vld [vmem:[%s1 + $0xd8] sm:$0xff]
        %v325 = vld [vmem:[%s1 + $0xe0] sm:$0xff]
        %v326 = vld [vmem:[%s1 + $0xe8] sm:$0xff]
        %v327 = vld [vmem:[%s1 + $0xf0] sm:$0xff]
        %v328 = vld [vmem:[%s1 + $0xf8] sm:$0xff]
        %v329 = vld [vmem:[%s2] sm:$0x1]
        %v362 = vlaneseq
        %v363 = vand.u32 %v362, 127
        %v364 = vperm.slane %v203, %v363
        %v365 = vadd.s32 %v363, 4294967288
        %v366 = vperm.slane %v206, %v365
        %vm367 = vcmask 130112
        %v368 = vsel %vm367, %v366, %v364
        %v369 = vadd.s32 %v363, 4294967280
        %v370 = vperm.slane %v209, %v369
        %vm371 = vcmask 195712
        %v372 = vsel %vm371, %v370, %v368
        %v373 = vadd.s32 %v363, 4294967272
        %v374 = vperm.slane %v212, %v373
        %vm375 = vcmask 261312
        %v376 = vsel %vm375, %v374, %v372
        %v377 = vadd.s32 %v363, 4294967264
        %v378 = vperm.slane %v215, %v377
        %vm379 = vcmask 326912
        %v380 = vsel %vm379, %v378, %v376
        %v381 = vadd.s32 %v363, 4294967256
        %v382 = vperm.slane %v218, %v381
        %vm383 = vcmask 392512
        %v384 = vsel %vm383, %v382, %v380
        %v385 = vadd.s32 %v363, 4294967248
        %v386 = vperm.slane %v221, %v385
        %vm387 = vcmask 458112
        %v388 = vsel %vm387, %v386, %v384
        %v389 = vadd.s32 %v363, 4294967240
        %v390 = vperm.slane %v224, %v389
        %vm391 = vcmask 523712
        %v392 = vsel %vm391, %v390, %v388
        %v393 = vadd.s32 %v363, 4294967232
        %v394 = vperm.slane %v227, %v393
        %vm395 = vcmask 589312
        %v396 = vsel %vm395, %v394, %v392
        %v397 = vadd.s32 %v363, 4294967224
        %v398 = vperm.slane %v230, %v397
        %vm399 = vcmask 654912
        %v400 = vsel %vm399, %v398, %v396
        %v401 = vadd.s32 %v363, 4294967216
        %v402 = vperm.slane %v233, %v401
        %vm403 = vcmask 720512
        %v404 = vsel %vm403, %v402, %v400
        %v405 = vadd.s32 %v363, 4294967208
        %v406 = vperm.slane %v236, %v405
        %vm407 = vcmask 786112
        %v408 = vsel %vm407, %v406, %v404
        %v409 = vadd.s32 %v363, 4294967200
        %v410 = vperm.slane %v239, %v409
        %vm411 = vcmask 851712
        %v412 = vsel %vm411, %v410, %v408
        %v413 = vadd.s32 %v363, 4294967192
        %v414 = vperm.slane %v242, %v413
        %vm415 = vcmask 917312
        %v416 = vsel %vm415, %v414, %v412
        %v417 = vadd.s32 %v363, 4294967184
        %v418 = vperm.slane %v245, %v417
        %vm419 = vcmask 982912
        %v420 = vsel %vm419, %v418, %v416
        %v421 = vadd.s32 %v363, 4294967176
        %v422 = vperm.slane %v248, %v421
        %vm423 = vcmask 1048512
        %v424 = vsel %vm423, %v422, %v420
        %v425 = vperm.slane %v251, %v363
        %v426 = vperm.slane %v254, %v365
        %v427 = vsel %vm367, %v426, %v425
        %v428 = vperm.slane %v257, %v369
        %v429 = vsel %vm371, %v428, %v427
        %v430 = vperm.slane %v260, %v373
        %v431 = vsel %vm375, %v430, %v429
        %v432 = vperm.slane %v263, %v377
        %v433 = vsel %vm379, %v432, %v431
        %v434 = vperm.slane %v266, %v381
        %v435 = vsel %vm383, %v434, %v433
        %v436 = vperm.slane %v269, %v385
        %v437 = vsel %vm387, %v436, %v435
        %v438 = vperm.slane %v272, %v389
        %v439 = vsel %vm391, %v438, %v437
        %v440 = vperm.slane %v275, %v393
        %v441 = vsel %vm395, %v440, %v439
        %v442 = vperm.slane %v278, %v397
        %v443 = vsel %vm399, %v442, %v441
        %v444 = vperm.slane %v281, %v401
        %v445 = vsel %vm403, %v444, %v443
        %v446 = vperm.slane %v284, %v405
        %v447 = vsel %vm407, %v446, %v445
        %v448 = vperm.slane %v287, %v409
        %v449 = vsel %vm411, %v448, %v447
        %v450 = vperm.slane %v290, %v413
        %v451 = vsel %vm415, %v450, %v449
        %v452 = vperm.slane %v293, %v417
        %v453 = vsel %vm419, %v452, %v451
        %v454 = vperm.slane %v296, %v421
        %v455 = vsel %vm423, %v454, %v453
        %458 = vmatpush.msra.mxu0 %v312
        %459 = vmatpush.msra.mxu0 %v311
        %460 = vmatpush.msra.mxu0 %v310
        %461 = vmatpush.msra.mxu0 %v309
        %462 = vmatpush.msra.mxu0 %v308
        %463 = vmatpush.msra.mxu0 %v307
        %464 = vmatpush.msra.mxu0 %v306
        %465 = vmatpush.msra.mxu0 %v305
        %466 = vmatpush.msra.mxu0 %v304
        %467 = vmatpush.msra.mxu0 %v303
        %468 = vmatpush.msra.mxu0 %v302
        %469 = vmatpush.msra.mxu0 %v301
        %470 = vmatpush.msra.mxu0 %v300
        %471 = vmatpush.msra.mxu0 %v299
        %472 = vmatpush.msra.mxu0 %v298
        %473 = vmatpush.msra.mxu0 %v297
        %474 = vmatmul.f32.gmra.mxu0 %v424
        %v475 = vpop.f32.mrf.mxu0
        %v476 = vadd.f32 %v329, %v475
        %477 = vdwg.mxu0
        %478 = vmatpush.msra.mxu0 %v328
        %479 = vmatpush.msra.mxu0 %v327
        %480 = vmatpush.msra.mxu0 %v326
        %481 = vmatpush.msra.mxu0 %v325
        %482 = vmatpush.msra.mxu0 %v324
        %483 = vmatpush.msra.mxu0 %v323
        %484 = vmatpush.msra.mxu0 %v322
        %485 = vmatpush.msra.mxu0 %v321
        %486 = vmatpush.msra.mxu0 %v320
        %487 = vmatpush.msra.mxu0 %v319
        %488 = vmatpush.msra.mxu0 %v318
        %489 = vmatpush.msra.mxu0 %v317
        %490 = vmatpush.msra.mxu0 %v316
        %491 = vmatpush.msra.mxu0 %v315
        %492 = vmatpush.msra.mxu0 %v314
        %493 = vmatpush.msra.mxu0 %v313
        %494 = vmatmul.f32.gmra.mxu0 %v455
        %v495 = vpop.f32.mrf.mxu0
        %v496 = vadd.f32 %v476, %v495
        %497 = vdwg.mxu0
        %498 = vst [vmem:[%s162] sm:$0x1] %v496
        %s499 = sand.u32 %s93, 1
        %s500 = scalar_lea.sflag [#allocation3], %s499
        %s501 = sand.u32 %s93, 1
        %s502 = scalar_lea.vmem [#allocation2], %s501
        // Predicated region
        $region33: #{tpu_custom_call.1} parent=31 // pred_check
          %p503 = pneg %p103
        $region34: #{tpu_custom_call.1} parent=31 // pred_check_branch
          %505 = sbr.rel (%p503) target = $region36
        $region35: #{tpu_custom_call.1} parent=31 // pred_region
          %507 = vsyncadd %s500, 0
          %s508 = scalar_lea.hbm %s3, %s17
          %s510 = sshll.u32 %s502, 4
          %s511 = int_to_ptr.vmem [resolvable:$true] %s510
          %s512 = sshll.u32 %s508, 4
          %s513 = int_to_ptr.hbm [resolvable:$true] %s512
          %515 = dma.vmem_to_hbm [thread:$0]  %s511, 16, %s513, %s500
        $region36: #{tpu_custom_call.1} parent=31 // pred_fallthru
          _
      $region32: #{tpu_custom_call.1} parent=5 // pred_fallthru
        _
      %p516 = scmp.le.s32.totalorder 2, %s12
      // Predicated region
      $region37: #{tpu_custom_call.1} parent=5 // pred_check
        %p517 = pneg %p516
      $region38: #{tpu_custom_call.1} parent=5 // pred_check_branch
        %519 = sbr.rel (%p517) target = $region40
      $region39: #{tpu_custom_call.1} parent=5 // pred_region
        %s520 = ssub.s32 %s12, 2
        // Predicated region
        $region41: #{tpu_custom_call.1} parent=39 // pred_check
          %p521 = pneg %p109
        $region42: #{tpu_custom_call.1} parent=39 // pred_check_branch
          %523 = sbr.rel (%p521) target = $region44
        $region43: #{tpu_custom_call.1} parent=39 // pred_region
          %s524 = sand.u32 %s94, 1
          %s525 = scalar_lea.sflag [#allocation3], %s524
          %s526 = sand.u32 %s94, 1
          %s527 = scalar_lea.vmem [#allocation2], %s526
          %529 = dma.done %s525, 16
        $region44: #{tpu_custom_call.1} parent=39 // pred_fallthru
          _
      $region40: #{tpu_custom_call.1} parent=5 // pred_fallthru
        _
    $region6: #{tpu_custom_call.1} parent=1 // loop_footer
      %s16 = sadd.s32 1, %s12
    $region7: #{tpu_custom_call.1} parent=1 // loop_footer_branch
      %11 = sbr.rel target = $region3
    $region8: #{tpu_custom_call.1} parent=1 // loop_exit
      _
    %530 = vsyncpa [#allocation3], 1
    %s531 = scalar_lea.sflag [#allocation3], 1
    %532 = vsyncpa %s531, 1

</llo_original>
